<compile_context>
chip_gen: v5e
topology: v5e:2x2
jax: 0.10.0
libtpu: 0.0.40
codegen_flags: <defaults>
</compile_context>

<pallas_src>
import jax
import jax.numpy as jnp
from jax import lax
from jax.experimental import pallas as pl
from jax.experimental.pallas import tpu as pltpu

# ---- synthetic PGConfig --------------------------------------------------
NFEATURES = 16          # PGConfig.nfeatures
HIDDEN = [32, 32]       # PGConfig.hidden_layer
INIT_STD = 0.02         # PGConfig.init_std
BATCH = 512             # example batch (2 parallel tiles of 256)


def _round_up(x, m):
    return ((x + m - 1) // m) * m


# ---- kernel --------------------------------------------------------------
def termination_kernel(x_ref,                    # (TILE_B, F)  f32 (native layout)
                       w0_ref, b0_ref,           # (H0, F) f32, (H0, 1) f32
                       w1_ref, b1_ref,           # (H1, H0) f32, (H1, 1) f32
                       w2_ref, b2_ref,           # (1,  H1) f32, (1, 1) f32
                       out_ref):                 # (1,  TILE_B) f32, lane-dense
    x = x_ref[...]                               # (TILE_B, F)
    # Hidden layer 0: contract the feature axis of both operands (NT matmul),
    # i.e. W0 @ x^T without any wrapper-side transpose -> (H0, TILE_B).
    h = jnp.tanh(
        lax.dot_general(w0_ref[...], x, (((1,), (1,)), ((), ())),
                        preferred_element_type=jnp.float32)
        + b0_ref[...]
    )
    # Hidden layer 1: (H1, H0) @ (H0, TILE_B) -> tanh.  Pure f32 (no bf16 casts).
    h = jnp.tanh(
        jnp.dot(w1_ref[...], h, preferred_element_type=jnp.float32) + b1_ref[...]
    )
    # Output layer: (1, H1) @ (H1, TILE_B) -> sigmoid; lane-dense (1, TILE_B) row.
    logits = (
        jnp.dot(w2_ref[...], h, preferred_element_type=jnp.float32) + b2_ref[...]
    )
    out_ref[...] = jax.nn.sigmoid(logits)


# ---- wrapper -------------------------------------------------------------
def pg_termination_forward(x, params):
    """x: (B, NFEATURES) float32 -> (B,) float32 termination probabilities."""
    (w0, b0), (w1, b1), (w2, b2) = params
    B, F = x.shape
    H0 = w0.shape[0]
    H1 = w1.shape[0]

    # Tile selection:
    #   * B >= 512: at least 2 tiles, each a multiple of 256 lanes (keeps the
    #     grid shardable across v7x's two TensorCores); capped at 4096 so a
    #     huge batch still pipelines its x DMAs.
    #   * B < 512: one full-array tile (single-TC v5e/v6e: fewest steps wins;
    #     the whole problem is a few KB).
    if B >= 512:
        tile_b = min(_round_up(pl.cdiv(B, 2), 256), 4096)
    else:
        tile_b = B
    n_tiles = pl.cdiv(B, tile_b)
    # NOTE: if B is not a multiple of tile_b, the padded columns of the last x
    # block hold unspecified data — safe here because every op is per-column
    # and OOB output columns are masked on store (no cross-batch reductions).

    const = lambda shape: pl.BlockSpec(shape, lambda i: (0, 0))

    weight_elems = H0 * F + H0 + H1 * H0 + H1 + H1 + 1
    cost = pl.CostEstimate(
        flops=2 * B * (F * H0 + H0 * H1 + H1),
        transcendentals=B * (H0 + H1 + 1),
        bytes_accessed=4 * (B * F + B + weight_elems),
    )

    out = pl.pallas_call(
        termination_kernel,
        out_shape=jax.ShapeDtypeStruct((1, B), jnp.float32),
        grid_spec=pltpu.PrefetchScalarGridSpec(
            num_scalar_prefetch=0,
            grid=(n_tiles,),                               # batch tiles
            in_specs=[
                pl.BlockSpec((tile_b, F), lambda i: (i, 0)),   # x, native layout
                const((H0, F)), const((H0, 1)),                # layer 0
                const((H1, H0)), const((H1, 1)),               # layer 1
                const((1, H1)), const((1, 1)),                 # output layer
            ],
            out_specs=pl.BlockSpec((1, tile_b), lambda i: (0, i)),
        ),
        compiler_params=pltpu.CompilerParams(
            dimension_semantics=("parallel",),             # shards tiles on v7x
        ),
        cost_estimate=cost,
    )(x, w0, b0, w1, b1, w2, b2)

    return out.reshape([-1])  # (1, B) -> (B,), matches torch .reshape([-1])


def init_params(key):
    """normal(0, INIT_STD) init, mirroring _init_weights; torch-native layout:
    weights are (out_dim, in_dim); biases kept as (out_dim, 1) columns so they
    broadcast across the lane (batch) axis inside the kernel."""
    dims = [NFEATURES] + HIDDEN + [1]
    params = []
    for i in range(len(dims) - 1):
        key, kw, kb = jax.random.split(key, 3)
        w = INIT_STD * jax.random.normal(kw, (dims[i + 1], dims[i]), jnp.float32)
        b = INIT_STD * jax.random.normal(kb, (dims[i + 1], 1), jnp.float32)
        params.append((w, b))
    return params


# ---- main ----------------------------------------------------------------
if __name__ == "__main__":
    key = jax.random.PRNGKey(0)
    key, kx = jax.random.split(key)
    x = jax.random.normal(kx, (BATCH, NFEATURES), jnp.float32)
    params = init_params(key)

    fwd = jax.jit(pg_termination_forward)
    y = fwd(x, params)
    jax.block_until_ready(y)

    # pure-JAX f32 reference check (kernel is all-f32; MXU f32 passes -> tight atol)
    (w0, b0), (w1, b1), (w2, b2) = params
    ref = jnp.tanh(x @ w0.T + b0.T)
    ref = jnp.tanh(ref @ w1.T + b1.T)
    ref = jax.nn.sigmoid(ref @ w2.T + b2.T).reshape([-1])
    assert y.shape == (BATCH,)
    assert jnp.allclose(y, ref, atol=2e-3), "mismatch vs reference"

    print("KERNEL_OK")
</pallas_src>

<mosaic_0001>
module attributes {stable_mosaic.version = 11 : i64} {
  func.func @termination_kernel(%arg0: i32, %arg1: memref<256x16xf32, #tpu.memory_space<vmem>>, %arg2: memref<32x16xf32, #tpu.memory_space<vmem>>, %arg3: memref<32x1xf32, #tpu.memory_space<vmem>>, %arg4: memref<32x32xf32, #tpu.memory_space<vmem>>, %arg5: memref<32x1xf32, #tpu.memory_space<vmem>>, %arg6: memref<1x32xf32, #tpu.memory_space<vmem>>, %arg7: memref<1x1xf32, #tpu.memory_space<vmem>>, %arg8: memref<1x256xf32, #tpu.memory_space<vmem>>) attributes {dimension_semantics = [#tpu.dimension_semantics<parallel>], iteration_bounds = array<i64: 2>, scalar_prefetch = 0 : i64, scratch_operands = 0 : i64, tpu.core_type = #tpu.core_type<tc>, window_params = [{transform_indices = @transform_0, window_bounds = array<i64: 256, 16>}, {pipeline_mode = #tpu.pipeline_mode<synchronous>, transform_indices = @transform_1, window_bounds = array<i64: 32, 16>}, {pipeline_mode = #tpu.pipeline_mode<synchronous>, transform_indices = @transform_2, window_bounds = array<i64: 32, 1>}, {pipeline_mode = #tpu.pipeline_mode<synchronous>, transform_indices = @transform_3, window_bounds = array<i64: 32, 32>}, {pipeline_mode = #tpu.pipeline_mode<synchronous>, transform_indices = @transform_4, window_bounds = array<i64: 32, 1>}, {pipeline_mode = #tpu.pipeline_mode<synchronous>, transform_indices = @transform_5, window_bounds = array<i64: 1, 32>}, {pipeline_mode = #tpu.pipeline_mode<synchronous>, transform_indices = @transform_6, window_bounds = array<i64: 1, 1>}, {transform_indices = @transform_7, window_bounds = array<i64: 1, 256>}]} {
    %c0 = arith.constant 0 : index
    %c0_0 = arith.constant 0 : index
    %0 = vector.load %arg1[%c0, %c0_0] : memref<256x16xf32, #tpu.memory_space<vmem>>, vector<256x16xf32>
    %c0_1 = arith.constant 0 : index
    %c0_2 = arith.constant 0 : index
    %1 = vector.load %arg2[%c0_1, %c0_2] : memref<32x16xf32, #tpu.memory_space<vmem>>, vector<32x16xf32>
    %cst = arith.constant dense<0.000000e+00> : vector<32x256xf32>
    %2 = tpu.matmul %1, %0, %cst {dimension_numbers = #tpu.dot_dimension_numbers<[1], [1], [0], [0], [0, 0, 1, 0], [], []>} : vector<32x16xf32>, vector<256x16xf32>, vector<32x256xf32> -> vector<32x256xf32>
    %c0_3 = arith.constant 0 : index
    %c0_4 = arith.constant 0 : index
    %3 = vector.load %arg3[%c0_3, %c0_4] : memref<32x1xf32, #tpu.memory_space<vmem>>, vector<32x1xf32>
    %4 = vector.broadcast %3 : vector<32x1xf32> to vector<32x256xf32>
    %5 = arith.addf %2, %4 : vector<32x256xf32>
    %6 = math.tanh %5 : vector<32x256xf32>
    %c0_5 = arith.constant 0 : index
    %c0_6 = arith.constant 0 : index
    %7 = vector.load %arg4[%c0_5, %c0_6] : memref<32x32xf32, #tpu.memory_space<vmem>>, vector<32x32xf32>
    %cst_7 = arith.constant dense<0.000000e+00> : vector<32x256xf32>
    %8 = tpu.matmul %7, %6, %cst_7 {dimension_numbers = #tpu.dot_dimension_numbers<[1], [0], [0], [1], [0, 0, 1, 1], [], []>} : vector<32x32xf32>, vector<32x256xf32>, vector<32x256xf32> -> vector<32x256xf32>
    %c0_8 = arith.constant 0 : index
    %c0_9 = arith.constant 0 : index
    %9 = vector.load %arg5[%c0_8, %c0_9] : memref<32x1xf32, #tpu.memory_space<vmem>>, vector<32x1xf32>
    %10 = vector.broadcast %9 : vector<32x1xf32> to vector<32x256xf32>
    %11 = arith.addf %8, %10 : vector<32x256xf32>
    %12 = math.tanh %11 : vector<32x256xf32>
    %c0_10 = arith.constant 0 : index
    %c0_11 = arith.constant 0 : index
    %13 = vector.load %arg6[%c0_10, %c0_11] : memref<1x32xf32, #tpu.memory_space<vmem>>, vector<1x32xf32>
    %cst_12 = arith.constant dense<0.000000e+00> : vector<1x256xf32>
    %14 = tpu.matmul %13, %12, %cst_12 {dimension_numbers = #tpu.dot_dimension_numbers<[1], [0], [0], [1], [0, 0, 1, 1], [], []>} : vector<1x32xf32>, vector<32x256xf32>, vector<1x256xf32> -> vector<1x256xf32>
    %c0_13 = arith.constant 0 : index
    %c0_14 = arith.constant 0 : index
    %15 = vector.load %arg7[%c0_13, %c0_14] : memref<1x1xf32, #tpu.memory_space<vmem>>, vector<1x1xf32>
    %16 = vector.broadcast %15 : vector<1x1xf32> to vector<1x256xf32>
    %17 = arith.addf %14, %16 : vector<1x256xf32>
    %18 = arith.negf %17 : vector<1x256xf32>
    %19 = math.exp %18 : vector<1x256xf32>
    %cst_15 = arith.constant 1.000000e+00 : f32
    %20 = vector.broadcast %cst_15 : f32 to vector<1x256xf32>
    %21 = arith.addf %20, %19 : vector<1x256xf32>
    %22 = arith.divf %20, %21 : vector<1x256xf32>
    %c0_16 = arith.constant 0 : index
    %c0_17 = arith.constant 0 : index
    %23 = vector.load %arg8[%c0_16, %c0_17] : memref<1x256xf32, #tpu.memory_space<vmem>>, vector<1x256xf32>
    tpu.vector_store %arg8[%c0_16, %c0_17], %22 {strides = array<i32>} : memref<1x256xf32, #tpu.memory_space<vmem>>, vector<1x256xf32>,
    return
  }
  func.func @transform_0(%arg0: i32) -> (i32, i32) {
    %c0_i32 = arith.constant 0 : i32
    %c0_i32_0 = arith.constant 0 : i32
    return %arg0, %c0_i32 : i32, i32
  }
  func.func @transform_1(%arg0: i32) -> (i32, i32) {
    %c0_i32 = arith.constant 0 : i32
    %c0_i32_0 = arith.constant 0 : i32
    %c0_i32_1 = arith.constant 0 : i32
    return %c0_i32, %c0_i32_0 : i32, i32
  }
  func.func @transform_2(%arg0: i32) -> (i32, i32) {
    %c0_i32 = arith.constant 0 : i32
    %c0_i32_0 = arith.constant 0 : i32
    %c0_i32_1 = arith.constant 0 : i32
    return %c0_i32, %c0_i32_0 : i32, i32
  }
  func.func @transform_3(%arg0: i32) -> (i32, i32) {
    %c0_i32 = arith.constant 0 : i32
    %c0_i32_0 = arith.constant 0 : i32
    %c0_i32_1 = arith.constant 0 : i32
    return %c0_i32, %c0_i32_0 : i32, i32
  }
  func.func @transform_4(%arg0: i32) -> (i32, i32) {
    %c0_i32 = arith.constant 0 : i32
    %c0_i32_0 = arith.constant 0 : i32
    %c0_i32_1 = arith.constant 0 : i32
    return %c0_i32, %c0_i32_0 : i32, i32
  }
  func.func @transform_5(%arg0: i32) -> (i32, i32) {
    %c0_i32 = arith.constant 0 : i32
    %c0_i32_0 = arith.constant 0 : i32
    %c0_i32_1 = arith.constant 0 : i32
    return %c0_i32, %c0_i32_0 : i32, i32
  }
  func.func @transform_6(%arg0: i32) -> (i32, i32) {
    %c0_i32 = arith.constant 0 : i32
    %c0_i32_0 = arith.constant 0 : i32
    %c0_i32_1 = arith.constant 0 : i32
    return %c0_i32, %c0_i32_0 : i32, i32
  }
  func.func @transform_7(%arg0: i32) -> (i32, i32) {
    %c0_i32 = arith.constant 0 : i32
    %c0_i32_0 = arith.constant 0 : i32
    return %c0_i32, %arg0 : i32, i32
  }
}

</mosaic_0001>

<llo_original>
// kernel: pg_termination_forward.1
$region0: #{pg_termination_forward.1}
  #allocation0 [shape = 'u32[]', space=smem, size = 0x4, offset = 0x4, fixed_abs, tag = 'smem constant byte address 0x4 - core index']
  #allocation1 [shape = 'u32[72,128]{1,0:T(1,128)}', space=vmem, size = 0x9000, scoped, tag = 'internal scratch']
  #allocation2 [shape = 'f32[1,1]{1,0:T(1,128)S(1)}', space=vmem, size = 0x200, scoped, tag = 'scoped memory for pg_termination_forward.1']
  %s0 = inlined_call_operand.vmem [shape: f32[512,16], index: 0, kind: input, shape index: {}]
  %s1 = inlined_call_operand.vmem [shape: f32[32,16], index: 1, kind: input, shape index: {}]
  %s2 = inlined_call_operand.vmem [shape: f32[32,1], index: 2, kind: input, shape index: {}]
  %s3 = inlined_call_operand.vmem [shape: f32[32,32], index: 3, kind: input, shape index: {}]
  %s4 = inlined_call_operand.vmem [shape: f32[32,1], index: 4, kind: input, shape index: {}]
  %s5 = inlined_call_operand.vmem [shape: f32[1,32], index: 5, kind: input, shape index: {}]
  %s6 = inlined_call_operand.<no memory space> [shape: f32[1,1], index: 6, kind: input, shape index: {}]
  %s7 = inlined_call_operand.hbm [shape: f32[1,512], index: 7, kind: output, shape index: {}]
  %s8 = sld [smem:[#allocation0]]
  $region61: #{pg_termination_forward.1} parent=0
    _
  %s10 = ssub.s32 1, %s8
  %s11 = scalar_select 0, %s10, %s8
  %v12 = vstv %s6
  %13 = vst [vmem:[#allocation2] sm:$0x1] %v12
  $region1: #{pg_termination_forward.1} parent=0
    #allocation3 [shape = 'u8[2048]{0}', space=vmem, size = 0x800, scoped, tag = 'output window, operand 0']
    #allocation4 [shape = 's32[2]{0}', space=sflag, size = 0x8, scoped, tag = 'scoped memory for pg_termination_forward.1']
    %14 = vsyncpa [#allocation4], 0
    %s15 = scalar_lea.sflag [#allocation4], 1
    %16 = vsyncpa %s15, 0
    loop: start=0, step=1, limit=4
    $region2: #{pg_termination_forward.1} parent=1 // loop_pre_header
      _
    $region3: #{pg_termination_forward.1} parent=1 // loop_header
      %s18 = sphi 0, %s22
      %p19 = scmp.ge.s32.totalorder %s18, 4
      %s28 = sphi 0, %s30
      %s31 = sphi 0, %s28
      %s32 = sphi 0, %s31
      %s48 = sphi 0, %s32
      %s52 = sphi 0, %s52
      %s54 = sphi 0, %s52
      %s55 = sphi 0, %s54
      %s69 = sphi 0, %s55
      %s73 = sphi 0, %s73
      %s75 = sphi 0, %s73
      %s76 = sphi 0, %s75
      %s90 = sphi 0, %s76
      %s94 = sphi 0, %s94
      %s96 = sphi 0, %s94
      %s97 = sphi 0, %s96
      %s111 = sphi 0, %s97
      %s115 = sphi 0, %s115
      %s117 = sphi 0, %s115
      %s118 = sphi 0, %s117
      %s132 = sphi 0, %s118
      %s136 = sphi 0, %s136
      %s138 = sphi 0, %s136
      %s139 = sphi 0, %s138
      %s153 = sphi 0, %s139
      %s157 = sphi 0, %s157
      %s159 = sphi 0, %s157
      %s160 = sphi 0, %s159
      %s174 = sphi 0, %s160
      %s180 = sphi 0, %s182
      %s183 = sphi 0, %s180
      %s184 = sphi 0, %s183
      %s200 = sphi 0, %s184
    $region4: #{pg_termination_forward.1} parent=1 // loop_header_branch
      %21 = sbr.rel (%p19) target = $region8
    $region5: #{pg_termination_forward.1} parent=1 // loop_body
      %s23 = ssub.s32 %s18, 1
      %s24 = ssub.s32 %s18, 2
      %s25 = sadd.s32 %s18, 1
      %s26 = ssub.s32 %s18, %s25
      %p27 = scmp.eq.s32.totalorder %s26, 0
      %s29 = sadd.s32 %s28, 1
      %s30 = scalar_select %p27, %s28, %s29
      %p33 = pneg %p27
      %p34 = scmp.eq.s32.totalorder %s18, 1
      %p35 = por %p33, %p34
      %p36 = scmp.ne.s32.totalorder %s28, %s31
      %p37 = scmp.eq.s32.totalorder %s18, 0
      %p38 = por %p36, %p37
      %p39 = scmp.ne.s32.totalorder %s28, %s31
      %p40 = scmp.eq.s32.totalorder %s23, 1
      %p41 = por %p39, %p40
      %p42 = scmp.ne.s32.totalorder %s31, %s32
      %p43 = scmp.eq.s32.totalorder %s23, 0
      %p44 = por %p42, %p43
      %p45 = scmp.ne.s32.totalorder %s31, %s32
      %p46 = scmp.eq.s32.totalorder %s24, 1
      %p47 = por %p45, %p46
      %p49 = scmp.ne.s32.totalorder %s32, %s48
      %p50 = scmp.eq.s32.totalorder %s24, 0
      %p51 = por %p49, %p50
      %s53 = sadd.s32 %s52, 1
      %p56 = scmp.eq.s32.totalorder %s18, 1
      %p57 = scmp.ne.s32.totalorder %s52, %s54
      %p58 = scmp.eq.s32.totalorder %s18, 0
      %p59 = por %p57, %p58
      %p60 = scmp.ne.s32.totalorder %s52, %s54
      %p61 = scmp.eq.s32.totalorder %s23, 1
      %p62 = por %p60, %p61
      %p63 = scmp.ne.s32.totalorder %s54, %s55
      %p64 = scmp.eq.s32.totalorder %s23, 0
      %p65 = por %p63, %p64
      %p66 = scmp.ne.s32.totalorder %s54, %s55
      %p67 = scmp.eq.s32.totalorder %s24, 1
      %p68 = por %p66, %p67
      %p70 = scmp.ne.s32.totalorder %s55, %s69
      %p71 = scmp.eq.s32.totalorder %s24, 0
      %p72 = por %p70, %p71
      %s74 = sadd.s32 %s73, 1
      %p77 = scmp.eq.s32.totalorder %s18, 1
      %p78 = scmp.ne.s32.totalorder %s73, %s75
      %p79 = scmp.eq.s32.totalorder %s18, 0
      %p80 = por %p78, %p79
      %p81 = scmp.ne.s32.totalorder %s73, %s75
      %p82 = scmp.eq.s32.totalorder %s23, 1
      %p83 = por %p81, %p82
      %p84 = scmp.ne.s32.totalorder %s75, %s76
      %p85 = scmp.eq.s32.totalorder %s23, 0
      %p86 = por %p84, %p85
      %p87 = scmp.ne.s32.totalorder %s75, %s76
      %p88 = scmp.eq.s32.totalorder %s24, 1
      %p89 = por %p87, %p88
      %p91 = scmp.ne.s32.totalorder %s76, %s90
      %p92 = scmp.eq.s32.totalorder %s24, 0
      %p93 = por %p91, %p92
      %s95 = sadd.s32 %s94, 1
      %p98 = scmp.eq.s32.totalorder %s18, 1
      %p99 = scmp.ne.s32.totalorder %s94, %s96
      %p100 = scmp.eq.s32.totalorder %s18, 0
      %p101 = por %p99, %p100
      %p102 = scmp.ne.s32.totalorder %s94, %s96
      %p103 = scmp.eq.s32.totalorder %s23, 1
      %p104 = por %p102, %p103
      %p105 = scmp.ne.s32.totalorder %s96, %s97
      %p106 = scmp.eq.s32.totalorder %s23, 0
      %p107 = por %p105, %p106
      %p108 = scmp.ne.s32.totalorder %s96, %s97
      %p109 = scmp.eq.s32.totalorder %s24, 1
      %p110 = por %p108, %p109
      %p112 = scmp.ne.s32.totalorder %s97, %s111
      %p113 = scmp.eq.s32.totalorder %s24, 0
      %p114 = por %p112, %p113
      %s116 = sadd.s32 %s115, 1
      %p119 = scmp.eq.s32.totalorder %s18, 1
      %p120 = scmp.ne.s32.totalorder %s115, %s117
      %p121 = scmp.eq.s32.totalorder %s18, 0
      %p122 = por %p120, %p121
      %p123 = scmp.ne.s32.totalorder %s115, %s117
      %p124 = scmp.eq.s32.totalorder %s23, 1
      %p125 = por %p123, %p124
      %p126 = scmp.ne.s32.totalorder %s117, %s118
      %p127 = scmp.eq.s32.totalorder %s23, 0
      %p128 = por %p126, %p127
      %p129 = scmp.ne.s32.totalorder %s117, %s118
      %p130 = scmp.eq.s32.totalorder %s24, 1
      %p131 = por %p129, %p130
      %p133 = scmp.ne.s32.totalorder %s118, %s132
      %p134 = scmp.eq.s32.totalorder %s24, 0
      %p135 = por %p133, %p134
      %s137 = sadd.s32 %s136, 1
      %p140 = scmp.eq.s32.totalorder %s18, 1
      %p141 = scmp.ne.s32.totalorder %s136, %s138
      %p142 = scmp.eq.s32.totalorder %s18, 0
      %p143 = por %p141, %p142
      %p144 = scmp.ne.s32.totalorder %s136, %s138
      %p145 = scmp.eq.s32.totalorder %s23, 1
      %p146 = por %p144, %p145
      %p147 = scmp.ne.s32.totalorder %s138, %s139
      %p148 = scmp.eq.s32.totalorder %s23, 0
      %p149 = por %p147, %p148
      %p150 = scmp.ne.s32.totalorder %s138, %s139
      %p151 = scmp.eq.s32.totalorder %s24, 1
      %p152 = por %p150, %p151
      %p154 = scmp.ne.s32.totalorder %s139, %s153
      %p155 = scmp.eq.s32.totalorder %s24, 0
      %p156 = por %p154, %p155
      %s158 = sadd.s32 %s157, 1
      %p161 = scmp.eq.s32.totalorder %s18, 1
      %p162 = scmp.ne.s32.totalorder %s157, %s159
      %p163 = scmp.eq.s32.totalorder %s18, 0
      %p164 = por %p162, %p163
      %p165 = scmp.ne.s32.totalorder %s157, %s159
      %p166 = scmp.eq.s32.totalorder %s23, 1
      %p167 = por %p165, %p166
      %p168 = scmp.ne.s32.totalorder %s159, %s160
      %p169 = scmp.eq.s32.totalorder %s23, 0
      %p170 = por %p168, %p169
      %p171 = scmp.ne.s32.totalorder %s159, %s160
      %p172 = scmp.eq.s32.totalorder %s24, 1
      %p173 = por %p171, %p172
      %p175 = scmp.ne.s32.totalorder %s160, %s174
      %p176 = scmp.eq.s32.totalorder %s24, 0
      %p177 = por %p175, %p176
      %s178 = ssub.s32 %s18, %s25
      %p179 = scmp.eq.s32.totalorder %s178, 0
      %s181 = sadd.s32 %s180, 1
      %s182 = scalar_select %p179, %s180, %s181
      %p185 = pneg %p179
      %p186 = scmp.eq.s32.totalorder %s18, 1
      %p187 = por %p185, %p186
      %p188 = scmp.ne.s32.totalorder %s180, %s183
      %p189 = scmp.eq.s32.totalorder %s18, 0
      %p190 = por %p188, %p189
      %p191 = scmp.ne.s32.totalorder %s180, %s183
      %p192 = scmp.eq.s32.totalorder %s23, 1
      %p193 = por %p191, %p192
      %p194 = scmp.ne.s32.totalorder %s183, %s184
      %p195 = scmp.eq.s32.totalorder %s23, 0
      %p196 = por %p194, %p195
      %p197 = scmp.ne.s32.totalorder %s183, %s184
      %p198 = scmp.eq.s32.totalorder %s24, 1
      %p199 = por %p197, %p198
      %p201 = scmp.ne.s32.totalorder %s184, %s200
      %p202 = scmp.eq.s32.totalorder %s24, 0
      %p203 = por %p201, %p202
      %p204 = scmp.le.s32.totalorder 1, %s18
      %p205 = scmp.lt.s32.totalorder %s18, 3
      %p206 = pnand %p204, %p205
      %p207 = pneg %p206
      // Predicated region
      $region9: #{pg_termination_forward.1} parent=5 // pred_check
        _
      $region10: #{pg_termination_forward.1} parent=5 // pred_check_branch
        %209 = sbr.rel (%p206) target = $region12
      $region11: #{pg_termination_forward.1} parent=5 // pred_region
        %s210 = ssub.s32 %s18, 1
        // Predicated region
        $region13: #{pg_termination_forward.1} parent=11 // pred_check
          %p211 = pneg %p65
        $region14: #{pg_termination_forward.1} parent=11 // pred_check_branch
          %213 = sbr.rel (%p211) target = $region16
        $region15: #{pg_termination_forward.1} parent=11 // pred_region
          _
        $region16: #{pg_termination_forward.1} parent=11 // pred_fallthru
          _
        // Predicated region
        $region17: #{pg_termination_forward.1} parent=11 // pred_check
          %p214 = pneg %p86
        $region18: #{pg_termination_forward.1} parent=11 // pred_check_branch
          %216 = sbr.rel (%p214) target = $region20
        $region19: #{pg_termination_forward.1} parent=11 // pred_region
          _
        $region20: #{pg_termination_forward.1} parent=11 // pred_fallthru
          _
        // Predicated region
        $region21: #{pg_termination_forward.1} parent=11 // pred_check
          %p217 = pneg %p107
        $region22: #{pg_termination_forward.1} parent=11 // pred_check_branch
          %219 = sbr.rel (%p217) target = $region24
        $region23: #{pg_termination_forward.1} parent=11 // pred_region
          _
        $region24: #{pg_termination_forward.1} parent=11 // pred_fallthru
          _
        // Predicated region
        $region25: #{pg_termination_forward.1} parent=11 // pred_check
          %p220 = pneg %p128
        $region26: #{pg_termination_forward.1} parent=11 // pred_check_branch
          %222 = sbr.rel (%p220) target = $region28
        $region27: #{pg_termination_forward.1} parent=11 // pred_region
          _
        $region28: #{pg_termination_forward.1} parent=11 // pred_fallthru
          _
        // Predicated region
        $region29: #{pg_termination_forward.1} parent=11 // pred_check
          %p223 = pneg %p149
        $region30: #{pg_termination_forward.1} parent=11 // pred_check_branch
          %225 = sbr.rel (%p223) target = $region32
        $region31: #{pg_termination_forward.1} parent=11 // pred_region
          _
        $region32: #{pg_termination_forward.1} parent=11 // pred_fallthru
          _
        // Predicated region
        $region33: #{pg_termination_forward.1} parent=11 // pred_check
          %p226 = pneg %p170
        $region34: #{pg_termination_forward.1} parent=11 // pred_check_branch
          %228 = sbr.rel (%p226) target = $region36
        $region35: #{pg_termination_forward.1} parent=11 // pred_region
          _
        $region36: #{pg_termination_forward.1} parent=11 // pred_fallthru
          _
      $region12: #{pg_termination_forward.1} parent=5 // pred_fallthru
        _
      %p229 = scmp.lt.s32.totalorder %s18, 2
      // Predicated region
      $region37: #{pg_termination_forward.1} parent=5 // pred_check
        %p230 = pneg %p229
      $region38: #{pg_termination_forward.1} parent=5 // pred_check_branch
        %232 = sbr.rel (%p230) target = $region40
      $region39: #{pg_termination_forward.1} parent=5 // pred_region
        // Predicated region
        $region41: #{pg_termination_forward.1} parent=39 // pred_check
          %p233 = pneg %p38
        $region42: #{pg_termination_forward.1} parent=39 // pred_check_branch
          %235 = sbr.rel (%p233) target = $region44
        $region43: #{pg_termination_forward.1} parent=39 // pred_region
          %s236 = smul.u32 32, %s18
          %p237 = scmp.lt.s32.totalorder %s236, 63
          %s238 = scalar_select %p237, %s236, 63
          %s239 = smul.addr %s238, 8
          %s240 = scalar_lea.vmem %s0, %s239
          %s241 = smul.u32 32, %s18
        $region44: #{pg_termination_forward.1} parent=39 // pred_fallthru
          _
      $region40: #{pg_termination_forward.1} parent=5 // pred_fallthru
        _
      %p242 = scmp.le.s32.totalorder 1, %s18
      %p243 = scmp.lt.s32.totalorder %s18, 3
      %p244 = pnand %p242, %p243
      %p245 = pneg %p244
      // Predicated region
      $region45: #{pg_termination_forward.1} parent=5 // pred_check
        _
      $region46: #{pg_termination_forward.1} parent=5 // pred_check_branch
        %247 = sbr.rel (%p244) target = $region48
      $region47: #{pg_termination_forward.1} parent=5 // pred_region
        %s248 = ssub.s32 %s18, 1
        %s249 = smul.u32 32, %s23
        %p250 = scmp.lt.s32.totalorder %s249, 63
        %s251 = scalar_select %p250, %s249, 63
        %s252 = smul.addr %s251, 8
        %s253 = scalar_lea.vmem %s0, %s252
        %p254 = pneg %p44
        %p255 = pneg %p41
        %p256 = pneg %p65
        %p257 = pneg %p62
        %p258 = pneg %p86
        %p259 = pneg %p83
        %p260 = pneg %p107
        %p261 = pneg %p104
        %p262 = pneg %p128
        %p263 = pneg %p125
        %p264 = pneg %p149
        %p265 = pneg %p146
        %p266 = pneg %p170
        %p267 = pneg %p167
        %p268 = pneg %p196
        %p269 = pneg %p193
        %s270 = sand.u32 %s183, 1
        %s271 = scalar_lea.sflag [#allocation4], %s270
        %s272 = sand.u32 %s183, 1
        %s273 = smul.addr %s272, 2
        %s274 = scalar_lea.vmem [#allocation3], %s273
        %s275 = smul.u32 32, %s23
        %p276 = scmp.lt.s32.totalorder %s275, 63
        %s277 = scalar_select %p276, %s275, 63
        %s278 = smul.addr %s277, 8
        %s279 = scalar_lea.vmem %s0, %s278
        %s280 = smul.u32 32, %s23
        %s281 = smul.u32 2, %s23
        %v282 = vld [vmem:[%s279] sm:$0xff]
        %v283 = vld [vmem:[%s279 + $0x8] sm:$0xff]
        %v284 = vld [vmem:[%s279 + $0x10] sm:$0xff]
        %v285 = vld [vmem:[%s279 + $0x18] sm:$0xff]
        %v286 = vld [vmem:[%s279 + $0x20] sm:$0xff]
        %v287 = vld [vmem:[%s279 + $0x28] sm:$0xff]
        %v288 = vld [vmem:[%s279 + $0x30] sm:$0xff]
        %v289 = vld [vmem:[%s279 + $0x38] sm:$0xff]
        %v290 = vld [vmem:[%s279 + $0x40] sm:$0xff]
        %v291 = vld [vmem:[%s279 + $0x48] sm:$0xff]
        %v292 = vld [vmem:[%s279 + $0x50] sm:$0xff]
        %v293 = vld [vmem:[%s279 + $0x58] sm:$0xff]
        %v294 = vld [vmem:[%s279 + $0x60] sm:$0xff]
        %v295 = vld [vmem:[%s279 + $0x68] sm:$0xff]
        %v296 = vld [vmem:[%s279 + $0x70] sm:$0xff]
        %v297 = vld [vmem:[%s279 + $0x78] sm:$0xff]
        %v298 = vld [vmem:[%s279 + $0x80] sm:$0xff]
        %v299 = vld [vmem:[%s279 + $0x88] sm:$0xff]
        %v300 = vld [vmem:[%s279 + $0x90] sm:$0xff]
        %v301 = vld [vmem:[%s279 + $0x98] sm:$0xff]
        %v302 = vld [vmem:[%s279 + $0xa0] sm:$0xff]
        %v303 = vld [vmem:[%s279 + $0xa8] sm:$0xff]
        %v304 = vld [vmem:[%s279 + $0xb0] sm:$0xff]
        %v305 = vld [vmem:[%s279 + $0xb8] sm:$0xff]
        %v306 = vld [vmem:[%s279 + $0xc0] sm:$0xff]
        %v307 = vld [vmem:[%s279 + $0xc8] sm:$0xff]
        %v308 = vld [vmem:[%s279 + $0xd0] sm:$0xff]
        %v309 = vld [vmem:[%s279 + $0xd8] sm:$0xff]
        %v310 = vld [vmem:[%s279 + $0xe0] sm:$0xff]
        %v311 = vld [vmem:[%s279 + $0xe8] sm:$0xff]
        %v312 = vld [vmem:[%s279 + $0xf0] sm:$0xff]
        %v313 = vld [vmem:[%s279 + $0xf8] sm:$0xff]
        %v314 = vld [vmem:[%s1] sm:$0xff]
        %v315 = vld [vmem:[%s1 + $0x8] sm:$0xff]
        %v316 = vld [vmem:[%s1 + $0x10] sm:$0xff]
        %v317 = vld [vmem:[%s1 + $0x18] sm:$0xff]
        %v318 = vld [vmem:[%s2] sm:$0xff]
        %v319 = vld [vmem:[%s2 + $0x8] sm:$0xff]
        %v320 = vld [vmem:[%s2 + $0x10] sm:$0xff]
        %v321 = vld [vmem:[%s2 + $0x18] sm:$0xff]
        %323 = vset.pattern.permute.xlu0 0
        %324 = vperm.xlu0 %323, %v318
        %v325 = vpop.permute.xlu0 %324
        %328 = vset.pattern.permute.xlu0 0
        %329 = vperm.xlu0 %328, %v319
        %v330 = vpop.permute.xlu0 %329
        %333 = vset.pattern.permute.xlu0 0
        %334 = vperm.xlu0 %333, %v320
        %v335 = vpop.permute.xlu0 %334
        %338 = vset.pattern.permute.xlu0 0
        %339 = vperm.xlu0 %338, %v321
        %v340 = vpop.permute.xlu0 %339
        %vm342 = vcmask 130048
        %v344 = vsel %vm342, %v314, 0
        %v347 = vsel %vm342, %v315, 0
        %v350 = vsel %vm342, %v316, 0
        %v353 = vsel %vm342, %v317, 0
        %v356 = vsel %vm342, %v282, 0
        %v359 = vsel %vm342, %v283, 0
        %v362 = vsel %vm342, %v284, 0
        %v365 = vsel %vm342, %v285, 0
        %v368 = vsel %vm342, %v286, 0
        %v371 = vsel %vm342, %v287, 0
        %v374 = vsel %vm342, %v288, 0
        %v377 = vsel %vm342, %v289, 0
        %v380 = vsel %vm342, %v290, 0
        %v383 = vsel %vm342, %v291, 0
        %v386 = vsel %vm342, %v292, 0
        %v389 = vsel %vm342, %v293, 0
        %v392 = vsel %vm342, %v294, 0
        %v395 = vsel %vm342, %v295, 0
        %v398 = vsel %vm342, %v296, 0
        %v401 = vsel %vm342, %v297, 0
        %v404 = vsel %vm342, %v298, 0
        %v407 = vsel %vm342, %v299, 0
        %v410 = vsel %vm342, %v300, 0
        %v413 = vsel %vm342, %v301, 0
        %v416 = vsel %vm342, %v302, 0
        %v419 = vsel %vm342, %v303, 0
        %v422 = vsel %vm342, %v304, 0
        %v425 = vsel %vm342, %v305, 0
        %v428 = vsel %vm342, %v306, 0
        %v431 = vsel %vm342, %v307, 0
        %v434 = vsel %vm342, %v308, 0
        %v437 = vsel %vm342, %v309, 0
        %v440 = vsel %vm342, %v310, 0
        %v443 = vsel %vm342, %v311, 0
        %v446 = vsel %vm342, %v312, 0
        %v449 = vsel %vm342, %v313, 0
        %451 = vmatpush.xpose.msra.mxu0 %v401
        %452 = vmatpush.xpose.msra.mxu0 %v398
        %453 = vmatpush.xpose.msra.mxu0 %v395
        %454 = vmatpush.xpose.msra.mxu0 %v392
        %455 = vmatpush.xpose.msra.mxu0 %v389
        %456 = vmatpush.xpose.msra.mxu0 %v386
        %457 = vmatpush.xpose.msra.mxu0 %v383
        %458 = vmatpush.xpose.msra.mxu0 %v380
        %459 = vmatpush.xpose.msra.mxu0 %v377
        %460 = vmatpush.xpose.msra.mxu0 %v374
        %461 = vmatpush.xpose.msra.mxu0 %v371
        %462 = vmatpush.xpose.msra.mxu0 %v368
        %463 = vmatpush.xpose.msra.mxu0 %v365
        %464 = vmatpush.xpose.msra.mxu0 %v362
        %465 = vmatpush.xpose.msra.mxu0 %v359
        %466 = vmatpush.xpose.msra.mxu0 %v356
        %467 = vmatmul.f32.gmra.mxu0 %v344
        %v468 = vpop.f32.mrf.mxu0
        %v469 = vadd.f32 %v325, %v468
        %470 = vmatmul.f32.gmra.mxu0 %v347
        %v471 = vpop.f32.mrf.mxu0
        %v472 = vadd.f32 %v330, %v471
        %473 = vmatmul.f32.gmra.mxu0 %v350
        %v474 = vpop.f32.mrf.mxu0
        %v475 = vadd.f32 %v335, %v474
        %476 = vmatmul.f32.gmra.mxu0 %v353
        %v477 = vpop.f32.mrf.mxu0
        %v478 = vadd.f32 %v340, %v477
        %479 = vdwg.mxu0
        %480 = vmatpush.xpose.msra.mxu0 %v449
        %481 = vmatpush.xpose.msra.mxu0 %v446
        %482 = vmatpush.xpose.msra.mxu0 %v443
        %483 = vmatpush.xpose.msra.mxu0 %v440
        %484 = vmatpush.xpose.msra.mxu0 %v437
        %485 = vmatpush.xpose.msra.mxu0 %v434
        %486 = vmatpush.xpose.msra.mxu0 %v431
        %487 = vmatpush.xpose.msra.mxu0 %v428
        %488 = vmatpush.xpose.msra.mxu0 %v425
        %489 = vmatpush.xpose.msra.mxu0 %v422
        %490 = vmatpush.xpose.msra.mxu0 %v419
        %491 = vmatpush.xpose.msra.mxu0 %v416
        %492 = vmatpush.xpose.msra.mxu0 %v413
        %493 = vmatpush.xpose.msra.mxu0 %v410
        %494 = vmatpush.xpose.msra.mxu0 %v407
        %495 = vmatpush.xpose.msra.mxu0 %v404
        %496 = vmatmul.f32.gmra.mxu0 %v344
        %v497 = vpop.f32.mrf.mxu0
        %v498 = vadd.f32 %v325, %v497
        %499 = vmatmul.f32.gmra.mxu0 %v347
        %v500 = vpop.f32.mrf.mxu0
        %v501 = vadd.f32 %v330, %v500
        %502 = vmatmul.f32.gmra.mxu0 %v350
        %v503 = vpop.f32.mrf.mxu0
        %v504 = vadd.f32 %v335, %v503
        %505 = vmatmul.f32.gmra.mxu0 %v353
        %v506 = vpop.f32.mrf.mxu0
        %v507 = vadd.f32 %v340, %v506
        %508 = vdwg.mxu0
        %v509 = vtanh.pop %v469
        %v510 = vtanh.pop %v498
        %v511 = vtanh.pop %v472
        %v512 = vtanh.pop %v501
        %v513 = vtanh.pop %v475
        %v514 = vtanh.pop %v504
        %v515 = vtanh.pop %v478
        %v516 = vtanh.pop %v507
        %v517 = vld [vmem:[%s3] sm:$0xff]
        %v518 = vld [vmem:[%s3 + $0x8] sm:$0xff]
        %v519 = vld [vmem:[%s3 + $0x10] sm:$0xff]
        %v520 = vld [vmem:[%s3 + $0x18] sm:$0xff]
        %v521 = vld [vmem:[%s4] sm:$0xff]
        %v522 = vld [vmem:[%s4 + $0x8] sm:$0xff]
        %v523 = vld [vmem:[%s4 + $0x10] sm:$0xff]
        %v524 = vld [vmem:[%s4 + $0x18] sm:$0xff]
        %526 = vset.pattern.permute.xlu0 0
        %527 = vperm.xlu0 %526, %v521
        %v528 = vpop.permute.xlu0 %527
        %531 = vset.pattern.permute.xlu0 0
        %532 = vperm.xlu0 %531, %v522
        %v533 = vpop.permute.xlu0 %532
        %536 = vset.pattern.permute.xlu0 0
        %537 = vperm.xlu0 %536, %v523
        %v538 = vpop.permute.xlu0 %537
        %541 = vset.pattern.permute.xlu0 0
        %542 = vperm.xlu0 %541, %v524
        %v543 = vpop.permute.xlu0 %542
        %vm545 = vcmask 261120
        %v547 = vsel %vm545, %v517, 0
        %v550 = vsel %vm545, %v518, 0
        %v553 = vsel %vm545, %v519, 0
        %v556 = vsel %vm545, %v520, 0
        %558 = vmatpush.msra.mxu0 0.0
        %559 = vmatpush.msra.mxu0 0.0
        %560 = vmatpush.msra.mxu0 0.0
        %561 = vmatpush.msra.mxu0 0.0
        %562 = vmatpush.msra.mxu0 0.0
        %563 = vmatpush.msra.mxu0 0.0
        %564 = vmatpush.msra.mxu0 0.0
        %565 = vmatpush.msra.mxu0 0.0
        %566 = vmatpush.msra.mxu0 0.0
        %567 = vmatpush.msra.mxu0 0.0
        %568 = vmatpush.msra.mxu0 0.0
        %569 = vmatpush.msra.mxu0 0.0
        %570 = vmatpush.msra.mxu0 %v515
        %571 = vmatpush.msra.mxu0 %v513
        %572 = vmatpush.msra.mxu0 %v511
        %573 = vmatpush.msra.mxu0 %v509
        %574 = vmatmul.f32.gmra.mxu0 %v547
        %v575 = vpop.f32.mrf.mxu0
        %v576 = vadd.f32 %v528, %v575
        %577 = vmatmul.f32.gmra.mxu0 %v550
        %v578 = vpop.f32.mrf.mxu0
        %v579 = vadd.f32 %v533, %v578
        %580 = vmatmul.f32.gmra.mxu0 %v553
        %v581 = vpop.f32.mrf.mxu0
        %v582 = vadd.f32 %v538, %v581
        %583 = vmatmul.f32.gmra.mxu0 %v556
        %v584 = vpop.f32.mrf.mxu0
        %v585 = vadd.f32 %v543, %v584
        %586 = vdwg.mxu0
        %587 = vmatpush.msra.mxu0 0.0
        %588 = vmatpush.msra.mxu0 0.0
        %589 = vmatpush.msra.mxu0 0.0
        %590 = vmatpush.msra.mxu0 0.0
        %591 = vmatpush.msra.mxu0 0.0
        %592 = vmatpush.msra.mxu0 0.0
        %593 = vmatpush.msra.mxu0 0.0
        %594 = vmatpush.msra.mxu0 0.0
        %595 = vmatpush.msra.mxu0 0.0
        %596 = vmatpush.msra.mxu0 0.0
        %597 = vmatpush.msra.mxu0 0.0
        %598 = vmatpush.msra.mxu0 0.0
        %599 = vmatpush.msra.mxu0 %v516
        %600 = vmatpush.msra.mxu0 %v514
        %601 = vmatpush.msra.mxu0 %v512
        %602 = vmatpush.msra.mxu0 %v510
        %603 = vmatmul.f32.gmra.mxu0 %v547
        %v604 = vpop.f32.mrf.mxu0
        %v605 = vadd.f32 %v528, %v604
        %606 = vmatmul.f32.gmra.mxu0 %v550
        %v607 = vpop.f32.mrf.mxu0
        %v608 = vadd.f32 %v533, %v607
        %609 = vmatmul.f32.gmra.mxu0 %v553
        %v610 = vpop.f32.mrf.mxu0
        %v611 = vadd.f32 %v538, %v610
        %612 = vmatmul.f32.gmra.mxu0 %v556
        %v613 = vpop.f32.mrf.mxu0
        %v614 = vadd.f32 %v543, %v613
        %615 = vdwg.mxu0
        %v616 = vtanh.pop %v576
        %v617 = vtanh.pop %v605
        %v618 = vtanh.pop %v579
        %v619 = vtanh.pop %v608
        %v620 = vtanh.pop %v582
        %v621 = vtanh.pop %v611
        %v622 = vtanh.pop %v585
        %v623 = vtanh.pop %v614
        %v624 = vld [vmem:[%s5] sm:$0x1]
        %v625 = vld [vmem:[#allocation2] sm:$0x1]
        %627 = vset.pattern.permute.xlu0 0
        %628 = vperm.xlu0 %627, %v625
        %v629 = vpop.permute.xlu0 %628
        %v631 = vperm.slane %v629, 0
        %v633 = vsel %vm545, %v624, 0
        %635 = vmatpush.msra.mxu0 0.0
        %636 = vmatpush.msra.mxu0 0.0
        %637 = vmatpush.msra.mxu0 0.0
        %638 = vmatpush.msra.mxu0 0.0
        %639 = vmatpush.msra.mxu0 0.0
        %640 = vmatpush.msra.mxu0 0.0
        %641 = vmatpush.msra.mxu0 0.0
        %642 = vmatpush.msra.mxu0 0.0
        %643 = vmatpush.msra.mxu0 0.0
        %644 = vmatpush.msra.mxu0 0.0
        %645 = vmatpush.msra.mxu0 0.0
        %646 = vmatpush.msra.mxu0 0.0
        %647 = vmatpush.msra.mxu0 %v622
        %648 = vmatpush.msra.mxu0 %v620
        %649 = vmatpush.msra.mxu0 %v618
        %650 = vmatpush.msra.mxu0 %v616
        %651 = vmatmul.f32.gmra.mxu0 %v633
        %v652 = vpop.f32.mrf.mxu0
        %v653 = vadd.f32 %v631, %v652
        %654 = vdwg.mxu0
        %655 = vmatpush.msra.mxu0 0.0
        %656 = vmatpush.msra.mxu0 0.0
        %657 = vmatpush.msra.mxu0 0.0
        %658 = vmatpush.msra.mxu0 0.0
        %659 = vmatpush.msra.mxu0 0.0
        %660 = vmatpush.msra.mxu0 0.0
        %661 = vmatpush.msra.mxu0 0.0
        %662 = vmatpush.msra.mxu0 0.0
        %663 = vmatpush.msra.mxu0 0.0
        %664 = vmatpush.msra.mxu0 0.0
        %665 = vmatpush.msra.mxu0 0.0
        %666 = vmatpush.msra.mxu0 0.0
        %667 = vmatpush.msra.mxu0 %v623
        %668 = vmatpush.msra.mxu0 %v621
        %669 = vmatpush.msra.mxu0 %v619
        %670 = vmatpush.msra.mxu0 %v617
        %671 = vmatmul.f32.gmra.mxu0 %v633
        %v672 = vpop.f32.mrf.mxu0
        %v673 = vadd.f32 %v631, %v672
        %674 = vdwg.mxu0
        %v675 = vxor.u32 %v653, 2147483648
        %v676 = vxor.u32 %v673, 2147483648
        %v677 = vmul.f32 %v675, 1.442695
        %v678 = vpow.pop %v677
        %v679 = vmul.f32 %v676, 1.442695
        %v680 = vpow.pop %v679
        %v681 = vadd.f32 %v678, 1.0
        %v682 = vadd.f32 %v680, 1.0
        %v683 = vrcp.pop %v681
        %v684 = vmul.f32 %v681, %v683
        %v685 = vsub.f32 1.0, %v684
        %v686 = vmul.f32 %v683, %v685
        %v687 = vadd.f32 %v683, %v686
        %vm688 = vweird.f32 %v681
        %vm689 = vweird.f32 %v683
        %vm690 = vmor %vm688, %vm689
        %v691 = vsel %vm690, %v683, %v687
        %v692 = vand.u32 2147483647, %v681
        %vm693 = vcmp.eq.f32.partialorder %v692, 8.507059e+37
        %v694 = vand.u32 %v681, 2147483648
        %v695 = vor.u32 1.1754944e-38, %v694
        %v696 = vsel %vm693, %v695, %v691
        %v697 = vmul.f32 1.0, %v696
        %v698 = vrcp.pop %v682
        %v699 = vmul.f32 %v682, %v698
        %v700 = vsub.f32 1.0, %v699
        %v701 = vmul.f32 %v698, %v700
        %v702 = vadd.f32 %v698, %v701
        %vm703 = vweird.f32 %v682
        %vm704 = vweird.f32 %v698
        %vm705 = vmor %vm703, %vm704
        %v706 = vsel %vm705, %v698, %v702
        %v707 = vand.u32 2147483647, %v682
        %vm708 = vcmp.eq.f32.partialorder %v707, 8.507059e+37
        %v709 = vand.u32 %v682, 2147483648
        %v710 = vor.u32 1.1754944e-38, %v709
        %v711 = vsel %vm708, %v710, %v706
        %v712 = vmul.f32 1.0, %v711
        %v715 = vrot.slane %v712, 7
        %vm716 = vcmask 1040384
        %v717 = vsel %vm716, %v697, %v715
        %v719 = vlaneseq
        %vm720 = vcmp.ge.s32.totalorder %v719, 0
        %vm721 = vcmp.lt.s32.totalorder %v719, 256
        %vm722 = vmand %vm720, %vm721
        %723 = vst.msk [vmem:[%s274] sm:$0x3] %vm722, %v717
        %s724 = sand.u32 %s183, 1
        %s725 = scalar_lea.sflag [#allocation4], %s724
        %s726 = sand.u32 %s183, 1
        %s727 = smul.addr %s726, 2
        %s728 = scalar_lea.vmem [#allocation3], %s727
        // Predicated region
        $region49: #{pg_termination_forward.1} parent=47 // pred_check
          %p729 = pneg %p193
        $region50: #{pg_termination_forward.1} parent=47 // pred_check_branch
          %731 = sbr.rel (%p729) target = $region52
        $region51: #{pg_termination_forward.1} parent=47 // pred_region
          %s732 = smul.u32 2, %s23
          %734 = vsyncadd %s725, 0
          %s735 = scalar_lea.hbm %s7, %s732
          %s737 = sshll.u32 %s728, 4
          %s738 = int_to_ptr.vmem [resolvable:$true] %s737
          %s739 = sshll.u32 %s735, 4
          %s740 = int_to_ptr.hbm [resolvable:$true] %s739
          %742 = dma.vmem_to_hbm [thread:$0]  %s738, 32, %s740, %s725
        $region52: #{pg_termination_forward.1} parent=47 // pred_fallthru
          _
      $region48: #{pg_termination_forward.1} parent=5 // pred_fallthru
        _
      %p743 = scmp.le.s32.totalorder 2, %s18
      // Predicated region
      $region53: #{pg_termination_forward.1} parent=5 // pred_check
        %p744 = pneg %p743
      $region54: #{pg_termination_forward.1} parent=5 // pred_check_branch
        %746 = sbr.rel (%p744) target = $region56
      $region55: #{pg_termination_forward.1} parent=5 // pred_region
        %s747 = ssub.s32 %s18, 2
        // Predicated region
        $region57: #{pg_termination_forward.1} parent=55 // pred_check
          %p748 = pneg %p199
        $region58: #{pg_termination_forward.1} parent=55 // pred_check_branch
          %750 = sbr.rel (%p748) target = $region60
        $region59: #{pg_termination_forward.1} parent=55 // pred_region
          %s751 = sand.u32 %s184, 1
          %s752 = scalar_lea.sflag [#allocation4], %s751
          %s753 = sand.u32 %s184, 1
          %s754 = smul.addr %s753, 2
          %s755 = scalar_lea.vmem [#allocation3], %s754
          %757 = dma.done %s752, 32
        $region60: #{pg_termination_forward.1} parent=55 // pred_fallthru
          _
      $region56: #{pg_termination_forward.1} parent=5 // pred_fallthru
        _
    $region6: #{pg_termination_forward.1} parent=1 // loop_footer
      %s22 = sadd.s32 1, %s18
    $region7: #{pg_termination_forward.1} parent=1 // loop_footer_branch
      %17 = sbr.rel target = $region3
    $region8: #{pg_termination_forward.1} parent=1 // loop_exit
      _
    %758 = vsyncpa [#allocation4], 1
    %s759 = scalar_lea.sflag [#allocation4], 1
    %760 = vsyncpa %s759, 1

</llo_original>
